<compile_context>
chip_gen: v7x
topology: tpu7x:2x2x1
jax: 0.10.0
libtpu: 0.0.40
codegen_flags: <defaults>
</compile_context>

<pallas_src>
import functools

import jax
import jax.numpy as jnp
from jax.experimental import pallas as pl
from jax.experimental.pallas import tpu as pltpu


# ----------------------------------------------------------------------------
# VMEM budgeting (TPU-generation aware)
# ----------------------------------------------------------------------------
def _vmem_budgets():
    """Return (big_operand_budget_bytes, vmem_limit_bytes) for the local TPU generation."""
    cap = None
    try:
        cap = getattr(pltpu.get_tpu_info(), "vmem_capacity_bytes", None)
    except Exception:
        cap = None
    if not cap or cap <= 0:
        cap = 64 * 1024 * 1024                       # conservative default (v7x-sized)
    if cap >= 100 * 1024 * 1024:                     # v5e / v6e: 128 MiB physical VMEM
        return 80 * 1024 * 1024, 100 * 1024 * 1024
    # v7x: 64 MiB per TensorCore -> leave headroom for the small sp/outer buffers and
    # compiler internal scratch.
    return 36 * 1024 * 1024, 52 * 1024 * 1024


def _sublane_tile(itemsize: int) -> int:
    """Minimum second-to-last block-dim tile: 8 for 4-byte, 16 for 2-byte, 32 for 1-byte."""
    return max(8, 32 // max(1, itemsize))


def _choose_blocks(B, C, HW, itemsize, *, n_big_streams, budget_bytes,
                   small_per_row_bytes=0, small_per_batch_bytes=0):
    """Pick (b_block, c_block) for a (b_block, c_block, HW) tiling.

    Approximate double-buffered per-step VMEM use:
        2 * (n_big_streams * b_block*c_block*HW*itemsize
             + b_block*c_block*small_per_row_bytes
             + b_block*small_per_batch_bytes)
    must stay under budget_bytes.  Bigger tiles -> fewer grid steps and larger DMAs
    (closer to the HBM roofline), so take the largest legal tile.
    """
    sub = _sublane_tile(itemsize)
    per_row = n_big_streams * HW * itemsize + small_per_row_bytes
    max_rows = max(1, budget_bytes // (2 * per_row))

    if C <= max_rows:
        c_block = C
    else:
        c_block = 0
        cb = (max_rows // sub) * sub
        while cb >= sub:
            if C % cb == 0:                          # sublane-aligned divisor of C
                c_block = cb
                break
            cb -= sub
        if c_block == 0:
            # TODO(synk): no sublane-aligned divisor of C fits the budget; the clean fix is
            # padding C to the next sublane multiple instead of one oversized full-C tile.
            c_block = C

    # Only grow batch blocking once the whole channel dim fits per step (keeps the
    # sp/outer index_maps trivial and the per-step DMAs large for small C*HW).
    b_block = 1
    if c_block == C:
        per_batch = 2 * (C * per_row + small_per_batch_bytes)
        max_b = max(1, budget_bytes // max(1, per_batch))
        for cand in range(min(B, max_b), 0, -1):
            if B % cand == 0:
                b_block = cand
                break
    return b_block, c_block


# ----------------------------------------------------------------------------
# Kernels
# ----------------------------------------------------------------------------
def _spatial_mean_kernel(mod_ref, sp_ref, *, inv_hw):
    """Pass 1: per-channel spatial mean on a lane-dense (Bb, Cb, H*W) tile.

    Lane (XLU) reduce over H*W + multiply by precomputed 1/(H*W); f32 accumulation.
    """
    m = mod_ref[...].astype(jnp.float32)                     # (Bb, Cb, HW)
    sp_ref[...] = jnp.sum(m, axis=-1, keepdims=True) * inv_hw  # (Bb, Cb, 1)


def _apply_kernel(x_ref, sp_ref, outer_ref, o_ref, *, op):
    """Pass 2: out = x + sp*outer  or  x * sigmoid(sp*outer), on (Bb, Cb, H*W) tiles."""
    mod = sp_ref[...] * outer_ref[...]                       # (Bb,Cb,1)*(Bb,1,HW) -> VPU, f32
    if op == "add":
        # Native-dtype add (bf16-native VALU on v6e/v7x; exact no-op cast for f32 inputs).
        o_ref[...] = (x_ref[...] + mod.astype(o_ref.dtype)).astype(o_ref.dtype)
    else:  # "mul"
        xv = x_ref[...].astype(jnp.float32)
        # Single-transcendental sigmoid: sigmoid(z) = 0.5 * tanh(0.5 * z) + 0.5 (one EUP op).
        gate = 0.5 * jnp.tanh(0.5 * mod) + 0.5
        o_ref[...] = (xv * gate).astype(o_ref.dtype)


# ----------------------------------------------------------------------------
# Wrapper
# ----------------------------------------------------------------------------
def low_rank_modulation(x, modulation, wh, bh, ww, bw, *, op="add", donate_x=False):
    """Pallas forward of LowRankModulation.

    x, modulation: (B, C, H, W).  wh: (H, C), bh: (H,), ww: (W, C), bw: (W,) (PyTorch Linear).
    Set donate_x=True (and donate x at the jit boundary) to write the output in place.
    """
    if op not in ("add", "mul"):
        raise NotImplementedError(f"Op {op} is not supported")

    B, C, H, W = x.shape
    assert modulation.shape == x.shape
    HW = H * W
    itemsize = x.dtype.itemsize

    budget, vmem_limit = _vmem_budgets()

    # Lane-dense views: the flattened spatial axis (H*W) maps to lanes, C to sublanes.
    x3 = x.reshape(B, C, HW)
    m3 = modulation.reshape(B, C, HW)

    # ------------------- Pass 1: per-channel spatial mean -------------------
    # Only ONE big double-buffered stream (modulation) -> ~2x pass-2 tiles.
    bb1, cb1 = _choose_blocks(
        B, C, HW, modulation.dtype.itemsize,
        n_big_streams=1, budget_bytes=budget,
        small_per_row_bytes=4,                               # sp output row (f32)
        small_per_batch_bytes=0)
    assert B % bb1 == 0 and C % cb1 == 0

    sp = pl.pallas_call(
        functools.partial(_spatial_mean_kernel, inv_hw=1.0 / HW),
        grid_spec=pltpu.PrefetchScalarGridSpec(
            num_scalar_prefetch=0,
            grid=(B // bb1, C // cb1),
            in_specs=[pl.BlockSpec((bb1, cb1, HW), lambda b, ct: (b, ct, 0))],
            out_specs=pl.BlockSpec((bb1, cb1, 1), lambda b, ct: (b, ct, 0)),
        ),
        out_shape=jax.ShapeDtypeStruct((B, C, 1), jnp.float32),
        compiler_params=pltpu.CompilerParams(
            dimension_semantics=("parallel", "parallel"),
            vmem_limit_bytes=vmem_limit,
        ),
        cost_estimate=pl.CostEstimate(
            flops=B * C * HW,
            transcendentals=0,
            bytes_accessed=B * C * HW * modulation.dtype.itemsize + B * C * 4,
        ),
    )(m3)

    # ---- Tiny projection + rank-1 outer product in plain XLA (negligible traffic) ----
    # hw = sp @ [Wh.T | Ww.T] + [bh | bw]  : B*C*(H+W) FLOPs — not worth a kernel, and
    # doing it here keeps pass 1 free of cross-channel accumulation (both axes parallel).
    wcat = jnp.concatenate([wh.T, ww.T], axis=1).astype(jnp.float32)   # (C, H+W)
    bcat = jnp.concatenate([bh, bw]).astype(jnp.float32)               # (H+W,)
    hw_vecs = sp[:, :, 0] @ wcat + bcat                                # (B, H+W) f32
    h_vec = hw_vecs[:, :H]                                             # (B, H)
    w_vec = hw_vecs[:, H:]                                             # (B, W)
    outer = (h_vec[:, :, None] * w_vec[:, None, :]).reshape(B, 1, HW)  # (B, 1, HW) f32

    # ---------------- Pass 2: elementwise apply (bandwidth-dominant phase) ----------------
    bb2, cb2 = _choose_blocks(
        B, C, HW, itemsize,
        n_big_streams=2, budget_bytes=budget,                # x tile + out tile
        small_per_row_bytes=4,                               # sp row (f32)
        small_per_batch_bytes=HW * 4)                        # outer block (f32)
    assert B % bb2 == 0 and C % cb2 == 0

    out3 = pl.pallas_call(
        functools.partial(_apply_kernel, op=op),
        grid_spec=pltpu.PrefetchScalarGridSpec(
            num_scalar_prefetch=0,
            grid=(B // bb2, C // cb2),
            in_specs=[
                pl.BlockSpec((bb2, cb2, HW), lambda b, ct: (b, ct, 0)),   # x (lane-dense)
                pl.BlockSpec((bb2, cb2, 1), lambda b, ct: (b, ct, 0)),    # sp
                pl.BlockSpec((bb2, 1, HW), lambda b, ct: (b, 0, 0)),      # outer (per batch)
            ],
            out_specs=pl.BlockSpec((bb2, cb2, HW), lambda b, ct: (b, ct, 0)),
        ),
        out_shape=jax.ShapeDtypeStruct((B, C, HW), x.dtype),
        compiler_params=pltpu.CompilerParams(
            dimension_semantics=("parallel", "parallel"),
            vmem_limit_bytes=vmem_limit,
        ),
        cost_estimate=pl.CostEstimate(
            flops=3 * B * C * HW,
            transcendentals=(B * C * HW) if op == "mul" else 0,
            bytes_accessed=2 * B * C * HW * itemsize + B * C * 4 + B * HW * 4,
        ),
        input_output_aliases=({0: 0} if donate_x else {}),
    )(x3, sp, outer)

    return out3.reshape(B, C, H, W)


# ----------------------------------------------------------------------------
# Pure-JAX reference matching the PyTorch module
# ----------------------------------------------------------------------------
def _reference(x, modulation, wh, bh, ww, bw, op="add"):
    sp = jnp.mean(modulation, axis=(2, 3))                   # (B, C)
    h = sp @ wh.T + bh                                       # (B, H)
    w = sp @ ww.T + bw                                       # (B, W)
    outer = h[:, None, :, None] * w[:, None, None, :]        # (B, 1, H, W)
    mod = sp[:, :, None, None] * outer                       # (B, C, H, W)
    if op == "add":
        return x + mod
    return x * jax.nn.sigmoid(mod)


if __name__ == "__main__":
    key = jax.random.PRNGKey(0)
    B, C, H, W = 2, 4, 16, 16
    kx, km, kwh, kbh, kww, kbw = jax.random.split(key, 6)

    x = jax.random.normal(kx, (B, C, H, W), dtype=jnp.float32)
    modulation = jax.random.normal(km, (B, C, H, W), dtype=jnp.float32)
    wh = 0.1 * jax.random.normal(kwh, (H, C), dtype=jnp.float32)
    bh = 0.1 * jax.random.normal(kbh, (H,), dtype=jnp.float32)
    ww = 0.1 * jax.random.normal(kww, (W, C), dtype=jnp.float32)
    bw = 0.1 * jax.random.normal(kbw, (W,), dtype=jnp.float32)

    fwd = jax.jit(low_rank_modulation, static_argnames=("op", "donate_x"))

    out_add = jax.block_until_ready(fwd(x, modulation, wh, bh, ww, bw, op="add"))
    out_mul = jax.block_until_ready(fwd(x, modulation, wh, bh, ww, bw, op="mul"))

    ref_add = _reference(x, modulation, wh, bh, ww, bw, op="add")
    ref_mul = _reference(x, modulation, wh, bh, ww, bw, op="mul")

    assert out_add.shape == x.shape and out_mul.shape == x.shape
    err_add = float(jnp.max(jnp.abs(out_add - ref_add)))
    err_mul = float(jnp.max(jnp.abs(out_mul - ref_mul)))
    assert jnp.allclose(out_add, ref_add, atol=1e-4, rtol=1e-4), f"add mismatch: {err_add}"
    assert jnp.allclose(out_mul, ref_mul, atol=1e-4, rtol=1e-4), f"mul mismatch: {err_mul}"

    # TODO(synk): the PyTorch module's `use_cache` / `self.cached` stateful caching of the
    # modulation tensor is Python module state and has no functional Pallas equivalent here.
    print("KERNEL_OK")
</pallas_src>

<mosaic_0001>
module attributes {stable_mosaic.version = 11 : i64} {
  func.func @_spatial_mean_kernel(%arg0: i32, %arg1: i32, %arg2: memref<2x4x256xf32, #tpu.memory_space<vmem>>, %arg3: memref<2x4x1xf32, #tpu.memory_space<vmem>>) attributes {dimension_semantics = [#tpu.dimension_semantics<parallel>, #tpu.dimension_semantics<parallel>], iteration_bounds = array<i64: 1, 1>, scalar_prefetch = 0 : i64, scratch_operands = 0 : i64, tpu.core_type = #tpu.core_type<tc>, window_params = [{transform_indices = @transform_0, window_bounds = array<i64: 2, 4, 256>}, {transform_indices = @transform_1, window_bounds = array<i64: 2, 4, 1>}]} {
    %c0 = arith.constant 0 : index
    %c0_0 = arith.constant 0 : index
    %c0_1 = arith.constant 0 : index
    %0 = vector.load %arg2[%c0, %c0_0, %c0_1] : memref<2x4x256xf32, #tpu.memory_space<vmem>>, vector<2x4x256xf32>
    %cst = arith.constant dense<0.000000e+00> : vector<2x4xf32>
    %1 = vector.multi_reduction <add>, %0, %cst [2] : vector<2x4x256xf32> to vector<2x4xf32>
    %2 = vector.shape_cast %1 : vector<2x4xf32> to vector<2x4x1xf32>
    %cst_2 = arith.constant 3.906250e-03 : f32
    %3 = vector.broadcast %cst_2 : f32 to vector<2x4x1xf32>
    %4 = arith.mulf %2, %3 : vector<2x4x1xf32>
    %c0_3 = arith.constant 0 : index
    %c0_4 = arith.constant 0 : index
    %c0_5 = arith.constant 0 : index
    %5 = vector.load %arg3[%c0_3, %c0_4, %c0_5] : memref<2x4x1xf32, #tpu.memory_space<vmem>>, vector<2x4x1xf32>
    tpu.vector_store %arg3[%c0_3, %c0_4, %c0_5], %4 {strides = array<i32>} : memref<2x4x1xf32, #tpu.memory_space<vmem>>, vector<2x4x1xf32>,
    return
  }
  func.func @transform_0(%arg0: i32, %arg1: i32) -> (i32, i32, i32) {
    %c0_i32 = arith.constant 0 : i32
    %c0_i32_0 = arith.constant 0 : i32
    return %arg0, %arg1, %c0_i32 : i32, i32, i32
  }
  func.func @transform_1(%arg0: i32, %arg1: i32) -> (i32, i32, i32) {
    %c0_i32 = arith.constant 0 : i32
    %c0_i32_0 = arith.constant 0 : i32
    return %arg0, %arg1, %c0_i32 : i32, i32, i32
  }
}

module attributes {stable_mosaic.version = 11 : i64} {
  func.func @_apply_kernel(%arg0: i32, %arg1: i32, %arg2: memref<2x4x256xf32, #tpu.memory_space<vmem>>, %arg3: memref<2x4x1xf32, #tpu.memory_space<vmem>>, %arg4: memref<2x1x256xf32, #tpu.memory_space<vmem>>, %arg5: memref<2x4x256xf32, #tpu.memory_space<vmem>>) attributes {dimension_semantics = [#tpu.dimension_semantics<parallel>, #tpu.dimension_semantics<parallel>], iteration_bounds = array<i64: 1, 1>, scalar_prefetch = 0 : i64, scratch_operands = 0 : i64, tpu.core_type = #tpu.core_type<tc>, window_params = [{transform_indices = @transform_0, window_bounds = array<i64: 2, 4, 256>}, {transform_indices = @transform_1, window_bounds = array<i64: 2, 4, 1>}, {transform_indices = @transform_2, window_bounds = array<i64: 2, 1, 256>}, {transform_indices = @transform_3, window_bounds = array<i64: 2, 4, 256>}]} {
    %c0 = arith.constant 0 : index
    %c0_0 = arith.constant 0 : index
    %c0_1 = arith.constant 0 : index
    %0 = vector.load %arg3[%c0, %c0_0, %c0_1] : memref<2x4x1xf32, #tpu.memory_space<vmem>>, vector<2x4x1xf32>
    %c0_2 = arith.constant 0 : index
    %c0_3 = arith.constant 0 : index
    %c0_4 = arith.constant 0 : index
    %1 = vector.load %arg4[%c0_2, %c0_3, %c0_4] : memref<2x1x256xf32, #tpu.memory_space<vmem>>, vector<2x1x256xf32>
    %2 = vector.broadcast %0 : vector<2x4x1xf32> to vector<2x4x256xf32>
    %3 = vector.broadcast %1 : vector<2x1x256xf32> to vector<2x4x256xf32>
    %4 = arith.mulf %2, %3 : vector<2x4x256xf32>
    %c0_5 = arith.constant 0 : index
    %c0_6 = arith.constant 0 : index
    %c0_7 = arith.constant 0 : index
    %5 = vector.load %arg2[%c0_5, %c0_6, %c0_7] : memref<2x4x256xf32, #tpu.memory_space<vmem>>, vector<2x4x256xf32>
    %6 = arith.addf %5, %4 : vector<2x4x256xf32>
    %c0_8 = arith.constant 0 : index
    %c0_9 = arith.constant 0 : index
    %c0_10 = arith.constant 0 : index
    %7 = vector.load %arg5[%c0_8, %c0_9, %c0_10] : memref<2x4x256xf32, #tpu.memory_space<vmem>>, vector<2x4x256xf32>
    tpu.vector_store %arg5[%c0_8, %c0_9, %c0_10], %6 {strides = array<i32>} : memref<2x4x256xf32, #tpu.memory_space<vmem>>, vector<2x4x256xf32>,
    return
  }
  func.func @transform_0(%arg0: i32, %arg1: i32) -> (i32, i32, i32) {
    %c0_i32 = arith.constant 0 : i32
    %c0_i32_0 = arith.constant 0 : i32
    return %arg0, %arg1, %c0_i32 : i32, i32, i32
  }
  func.func @transform_1(%arg0: i32, %arg1: i32) -> (i32, i32, i32) {
    %c0_i32 = arith.constant 0 : i32
    %c0_i32_0 = arith.constant 0 : i32
    return %arg0, %arg1, %c0_i32 : i32, i32, i32
  }
  func.func @transform_2(%arg0: i32, %arg1: i32) -> (i32, i32, i32) {
    %c0_i32 = arith.constant 0 : i32
    %c0_i32_0 = arith.constant 0 : i32
    %c0_i32_1 = arith.constant 0 : i32
    return %arg0, %c0_i32, %c0_i32_0 : i32, i32, i32
  }
  func.func @transform_3(%arg0: i32, %arg1: i32) -> (i32, i32, i32) {
    %c0_i32 = arith.constant 0 : i32
    %c0_i32_0 = arith.constant 0 : i32
    return %arg0, %arg1, %c0_i32 : i32, i32, i32
  }
}

</mosaic_0001>

<llo_original>
// kernel: low_rank_modulation.2
$region0: #{low_rank_modulation.2}
  #allocation0 [shape = 'u32[]', space=smem, size = 0x4, offset = 0x4, fixed_abs, tag = 'smem constant byte address 0x4 - core index']
  #allocation1 [shape = 'u32[144,128]{1,0:T(1,128)}', space=vmem, size = 0x12000, scoped, tag = 'internal scratch']
  %s0 = inlined_call_operand.vmem [shape: f32[2,4,256], index: 0, kind: input, shape index: {}]
  %s1 = inlined_call_operand.vmem [shape: f32[2,4,1], index: 1, kind: output, shape index: {}]
  %s2 = sld [smem:[#allocation0]]
  $region14: #{low_rank_modulation.2} parent=0
    _
  %s4 = ssub.s32 1, %s2
  %s5 = scalar_select 0, %s4, %s2
  // Predicated region
  $region2: #{low_rank_modulation.2} parent=0 // pred_check
    _
  $region3: #{low_rank_modulation.2} parent=0 // pred_check_branch
    %7 = sbr.rel (0) target = $region5
  $region4: #{low_rank_modulation.2} parent=0 // pred_region
    _
  $region5: #{low_rank_modulation.2} parent=0 // pred_fallthru
    _
  %v8 = vld [vmem:[%s0] sm:$0xff]
  %v9 = vld [vmem:[%s0 + $0x8] sm:$0xff]
  %v12 = vcombine.high %v8, %v8
  %v13 = vcombine.high %v9, %v9
  %vm16 = vcmask 1043456
  %v17 = vsel %vm16, %v8, 0.0
  %v18 = vsel %vm16, %v12, 0.0
  %v19 = vadd.f32 %v17, %v18
  %20 = vadd.xlane.f32.xlu0 %v19
  %v21 = vpop.xlane.xlu0 %20
  %v22 = vsel %vm16, %v9, 0.0
  %v23 = vsel %vm16, %v13, 0.0
  %v24 = vadd.f32 %v22, %v23
  %25 = vadd.xlane.f32.xlu0 %v24
  %v26 = vpop.xlane.xlu0 %25
  %v27 = vmul.f32 %v21, 0.00390625
  %v28 = vmul.f32 %v26, 0.00390625
  %vm29 = vcmask 3072
  %30 = vst.msk [vmem:[%s1] sm:$0xf] %vm29, %v27
  %31 = vst.msk [vmem:[%s1 + $0x4] sm:$0xf] %vm29, %v28
  // Predicated region
  $region6: #{low_rank_modulation.2} parent=0 // pred_check
    _
  $region7: #{low_rank_modulation.2} parent=0 // pred_check_branch
    %33 = sbr.rel (0) target = $region9
  $region8: #{low_rank_modulation.2} parent=0 // pred_region
    _
  $region9: #{low_rank_modulation.2} parent=0 // pred_fallthru
    _
  // Predicated region
  $region10: #{low_rank_modulation.2} parent=0 // pred_check
    _
  $region11: #{low_rank_modulation.2} parent=0 // pred_check_branch
    %35 = sbr.rel (0) target = $region13
  $region12: #{low_rank_modulation.2} parent=0 // pred_region
    _
  $region13: #{low_rank_modulation.2} parent=0 // pred_fallthru
    _

// kernel: low_rank_modulation.3
$region0: #{low_rank_modulation.3}
  #allocation0 [shape = 'u32[]', space=smem, size = 0x4, offset = 0x4, fixed_abs, tag = 'smem constant byte address 0x4 - core index']
  #allocation1 [shape = 'u32[144,128]{1,0:T(1,128)}', space=vmem, size = 0x12000, scoped, tag = 'internal scratch']
  %s0 = inlined_call_operand.vmem [shape: f32[2,4,256], index: 0, kind: input, shape index: {}]
  %s1 = inlined_call_operand.vmem [shape: f32[2,4,1], index: 1, kind: input, shape index: {}]
  %s2 = inlined_call_operand.vmem [shape: f32[2,1,256], index: 2, kind: input, shape index: {}]
  %s3 = inlined_call_operand.vmem [shape: f32[2,4,256], index: 3, kind: output, shape index: {}]
  %s4 = sld [smem:[#allocation0]]
  $region22: #{low_rank_modulation.3} parent=0
    _
  %s6 = ssub.s32 1, %s4
  %s7 = scalar_select 0, %s6, %s4
  // Predicated region
  $region2: #{low_rank_modulation.3} parent=0 // pred_check
    _
  $region3: #{low_rank_modulation.3} parent=0 // pred_check_branch
    %9 = sbr.rel (0) target = $region5
  $region4: #{low_rank_modulation.3} parent=0 // pred_region
    _
  $region5: #{low_rank_modulation.3} parent=0 // pred_fallthru
    _
  // Predicated region
  $region6: #{low_rank_modulation.3} parent=0 // pred_check
    _
  $region7: #{low_rank_modulation.3} parent=0 // pred_check_branch
    %11 = sbr.rel (0) target = $region9
  $region8: #{low_rank_modulation.3} parent=0 // pred_region
    _
  $region9: #{low_rank_modulation.3} parent=0 // pred_fallthru
    _
  // Predicated region
  $region10: #{low_rank_modulation.3} parent=0 // pred_check
    _
  $region11: #{low_rank_modulation.3} parent=0 // pred_check_branch
    %13 = sbr.rel (0) target = $region13
  $region12: #{low_rank_modulation.3} parent=0 // pred_region
    _
  $region13: #{low_rank_modulation.3} parent=0 // pred_fallthru
    _
  %v14 = vld [vmem:[%s1] sm:$0xf]
  %v15 = vld [vmem:[%s1 + $0x4] sm:$0xf]
  %v16 = vld [vmem:[%s2] sm:$0x3]
  %v17 = vld [vmem:[%s2 + $0x2] sm:$0x3]
  %19 = vset.pattern.permute.xlu0 0
  %20 = vperm.xlu0 %19, %v14
  %v21 = vpop.permute.xlu0 %20
  %24 = vset.pattern.permute.xlu0 0
  %25 = vperm.xlu0 %24, %v15
  %v26 = vpop.permute.xlu0 %25
  %v30 = vlaneseq
  %v31 = vshrl.u32 %v30, 7
  %v32 = vsub.s32 0, %v31
  %v33 = vrot.slane %v16, %v32
  %v34 = vlaneseq
  %v35 = vshrl.u32 %v34, 7
  %v36 = vsub.s32 1, %v35
  %v37 = vrot.slane %v16, %v36
  %v38 = vlaneseq
  %v39 = vshrl.u32 %v38, 7
  %v40 = vsub.s32 0, %v39
  %v41 = vrot.slane %v17, %v40
  %v42 = vlaneseq
  %v43 = vshrl.u32 %v42, 7
  %v44 = vsub.s32 1, %v43
  %v45 = vrot.slane %v17, %v44
  %v50 = vmul.f32 %v21, %v33
  %v51 = vmul.f32 %v21, %v37
  %v52 = vmul.f32 %v26, %v41
  %v53 = vmul.f32 %v26, %v45
  %v54 = vld [vmem:[%s0] sm:$0xff]
  %v55 = vld [vmem:[%s0 + $0x8] sm:$0xff]
  %v60 = vcombine.low %v50, %v51
  %v61 = vcombine.low %v52, %v53
  %v64 = vadd.f32 %v54, %v60
  %v65 = vadd.f32 %v55, %v61
  %66 = vst [vmem:[%s3] sm:$0xff] %v64
  %67 = vst [vmem:[%s3 + $0x8] sm:$0xff] %v65
  // Predicated region
  $region14: #{low_rank_modulation.3} parent=0 // pred_check
    _
  $region15: #{low_rank_modulation.3} parent=0 // pred_check_branch
    %69 = sbr.rel (0) target = $region17
  $region16: #{low_rank_modulation.3} parent=0 // pred_region
    _
  $region17: #{low_rank_modulation.3} parent=0 // pred_fallthru
    _
  // Predicated region
  $region18: #{low_rank_modulation.3} parent=0 // pred_check
    _
  $region19: #{low_rank_modulation.3} parent=0 // pred_check_branch
    %71 = sbr.rel (0) target = $region21
  $region20: #{low_rank_modulation.3} parent=0 // pred_region
    _
  $region21: #{low_rank_modulation.3} parent=0 // pred_fallthru
    _

</llo_original>
